<compile_context>
chip_gen: v6e
topology: v6e:2x2x1
jax: 0.10.0
libtpu: 0.0.40
codegen_flags: <defaults>
</compile_context>

<pallas_src>
import jax
import jax.numpy as jnp
from jax.experimental import pallas as pl
from jax.experimental.pallas import tpu as pltpu

IN_F = 2        # fc1 input features
HID_F = 2       # fc1 output features
OUT_F = 1       # each head's output features

LANE = 128              # batch elements per lane-row
SUBLANES = 8            # sublane granularity for tiled blocks
MAX_TILE_ROWS = 2048    # rows per grid step: 2048*128 = 256K elements, 2 MiB/plane
MIN_ROWS_TO_SPLIT = 16  # below this (<= 2048 elements) a single tile is cheapest


def _cdiv(a, b):
    return -(-a // b)


def _round_up(n, m):
    return _cdiv(n, m) * m


def _choose_tiling(batch):
    """Returns (rows_padded, tile_rows, n_tiles) for a batch of `batch` elements."""
    rows = _cdiv(max(batch, 1), LANE)
    if rows <= MIN_ROWS_TO_SPLIT:
        # Tiny problem: one full-extent block (full-dim blocks are exempt from the
        # (8,128) divisibility rule).
        return rows, rows, 1
    # >= 2 tiles so v7x can shard the "parallel" axis over both TensorCores,
    # more if one tile would exceed MAX_TILE_ROWS.
    want_tiles = max(2, _cdiv(rows, MAX_TILE_ROWS))
    tile_rows = min(MAX_TILE_ROWS, _round_up(_cdiv(rows, want_tiles), SUBLANES))
    n_tiles = _cdiv(rows, tile_rows)          # balanced: pads at most ~8 rows/tile
    return n_tiles * tile_rows, tile_rows, n_tiles


def _mhlr_kernel(theta_ref, x_ref, out_ref):
    """theta_ref: (12,) f32 in SMEM.
    x_ref:   (2, R, 128) f32 — [feature, batch-row, batch-lane].
    out_ref: (2, R, 128) f32 — row 0 = head1, row 1 = head2."""
    x0 = x_ref[0]                  # (R, 128) feature 0, batch dense on sublanes x lanes
    x1 = x_ref[1]                  # (R, 128) feature 1

    # fc1 weights stored (in, out): theta[0..3] = w1[0,0], w1[0,1], w1[1,0], w1[1,1]
    w1_00 = theta_ref[0]
    w1_01 = theta_ref[1]
    w1_10 = theta_ref[2]
    w1_11 = theta_ref[3]
    b1_0 = theta_ref[4]
    b1_1 = theta_ref[5]
    wh1_0 = theta_ref[6]
    wh1_1 = theta_ref[7]
    bh1 = theta_ref[8]
    wh2_0 = theta_ref[9]
    wh2_1 = theta_ref[10]
    bh2 = theta_ref[11]

    # fc1 + ReLU: broadcasted scalar*vector multiply-adds on dense (R,128) vregs.
    h0 = jnp.maximum(x0 * w1_00 + x1 * w1_10 + b1_0, 0.0)   # (R, 128)
    h1 = jnp.maximum(x0 * w1_01 + x1 * w1_11 + b1_1, 0.0)   # (R, 128)

    # Heads written directly (no concatenate temporary): unmasked dense stores.
    out_ref[0] = h0 * wh1_0 + h1 * wh1_1 + bh1
    out_ref[1] = h0 * wh2_0 + h1 * wh2_1 + bh2


def multi_head_logistic_regression(x, params):
    """x: (B, 2) float32. Returns (y1, y2), each (B, 1) float32."""
    w1, b1, wh1, bh1, wh2, bh2 = params
    B = x.shape[0]

    # Pack the 12 model scalars into one SMEM-resident f32 vector.
    theta = jnp.concatenate([
        w1.reshape(-1).astype(jnp.float32),    # [w1[0,0], w1[0,1], w1[1,0], w1[1,1]]
        b1.reshape(-1).astype(jnp.float32),    # [b1[0], b1[1]]
        wh1.reshape(-1).astype(jnp.float32),   # [wh1[0,0], wh1[1,0]]
        bh1.reshape(-1).astype(jnp.float32),   # [bh1[0]]
        wh2.reshape(-1).astype(jnp.float32),   # [wh2[0,0], wh2[1,0]]
        bh2.reshape(-1).astype(jnp.float32),   # [bh2[0]]
    ])

    rows_padded, tile_rows, n_tiles = _choose_tiling(B)
    Bp = rows_padded * LANE

    # Feature-major, sublane-dense relayout: (B,2) -> (2, rows, 128).
    # NOTE: if the caller can provide a feature-major (2, B) array upstream,
    # this transpose+pad (one extra HBM pass over the input) goes away.
    xt = jnp.pad(x.astype(jnp.float32).T, ((0, 0), (0, Bp - B)))   # (2, Bp)
    x3 = xt.reshape(2, rows_padded, LANE)

    out = pl.pallas_call(
        _mhlr_kernel,
        out_shape=jax.ShapeDtypeStruct((2, rows_padded, LANE), jnp.float32),
        grid=(n_tiles,),
        in_specs=[
            pl.BlockSpec(memory_space=pltpu.MemorySpace.SMEM),            # theta (12,)
            pl.BlockSpec((2, tile_rows, LANE), lambda i: (0, i, 0)),      # x tile
        ],
        out_specs=pl.BlockSpec((2, tile_rows, LANE), lambda i: (0, i, 0)),
        compiler_params=pltpu.CompilerParams(
            dimension_semantics=("parallel",),
            vmem_limit_bytes=32 * 1024 * 1024,
        ),
        cost_estimate=pl.CostEstimate(
            flops=18 * Bp,                 # 8 mul + 8 add + 2 max per element
            transcendentals=0,
            bytes_accessed=16 * Bp + 48,   # 8 B in + 8 B out per element + theta
        ),
    )(theta, x3)

    flat = out.reshape(2, Bp)
    y1 = flat[0, :B].reshape(B, OUT_F)
    y2 = flat[1, :B].reshape(B, OUT_F)
    return y1, y2


def init_params(key):
    """Deterministic init matching the PyTorch module's shapes.

    Mimics nn.Linear's uniform(-1/sqrt(fan_in), 1/sqrt(fan_in)) init.
    Weights are stored as (in_features, out_features).
    """
    k1, k2, k3, k4, k5, k6 = jax.random.split(key, 6)
    bound_fc1 = 1.0 / jnp.sqrt(float(IN_F))
    bound_head = 1.0 / jnp.sqrt(float(HID_F))
    w1 = jax.random.uniform(k1, (IN_F, HID_F), jnp.float32, -bound_fc1, bound_fc1)
    b1 = jax.random.uniform(k2, (HID_F,), jnp.float32, -bound_fc1, bound_fc1)
    wh1 = jax.random.uniform(k3, (HID_F, OUT_F), jnp.float32, -bound_head, bound_head)
    bh1 = jax.random.uniform(k4, (OUT_F,), jnp.float32, -bound_head, bound_head)
    wh2 = jax.random.uniform(k5, (HID_F, OUT_F), jnp.float32, -bound_head, bound_head)
    bh2 = jax.random.uniform(k6, (OUT_F,), jnp.float32, -bound_head, bound_head)
    return (w1, b1, wh1, bh1, wh2, bh2)


def _reference(x, params):
    w1, b1, wh1, bh1, wh2, bh2 = params
    h = jnp.maximum(x @ w1 + b1, 0.0)
    return h @ wh1 + bh1, h @ wh2 + bh2


if __name__ == "__main__":
    key = jax.random.PRNGKey(0)
    kx, kp, kx2 = jax.random.split(key, 3)

    params = init_params(kp)
    fwd = jax.jit(multi_head_logistic_regression)

    # Small, spec-consistent example: batch=8, in_features=2.
    B = 8
    x = jax.random.normal(kx, (B, IN_F), jnp.float32)
    y1, y2 = fwd(x, params)
    jax.block_until_ready((y1, y2))
    r1, r2 = _reference(x, params)
    assert y1.shape == (B, OUT_F) and y2.shape == (B, OUT_F)
    assert jnp.allclose(y1, r1, atol=1e-5, rtol=1e-5)
    assert jnp.allclose(y2, r2, atol=1e-5, rtol=1e-5)

    # Extra check exercising the multi-tile ("parallel" grid > 1) path.
    B2 = 4096
    x2 = jax.random.normal(kx2, (B2, IN_F), jnp.float32)
    z1, z2 = fwd(x2, params)
    jax.block_until_ready((z1, z2))
    s1, s2 = _reference(x2, params)
    assert jnp.allclose(z1, s1, atol=1e-5, rtol=1e-5)
    assert jnp.allclose(z2, s2, atol=1e-5, rtol=1e-5)

    print("KERNEL_OK")
</pallas_src>

<mosaic_0001>
module attributes {stable_mosaic.version = 11 : i64} {
  func.func @_mhlr_kernel(%arg0: i32, %arg1: memref<12xf32, #tpu.memory_space<smem>>, %arg2: memref<2x1x128xf32, #tpu.memory_space<vmem>>, %arg3: memref<2x1x128xf32, #tpu.memory_space<vmem>>) attributes {dimension_semantics = [#tpu.dimension_semantics<parallel>], iteration_bounds = array<i64: 1>, scalar_prefetch = 0 : i64, scratch_operands = 0 : i64, tpu.core_type = #tpu.core_type<tc>, window_params = [{transform_indices = @transform_0, window_bounds = array<i64: 12>}, {transform_indices = @transform_1, window_bounds = array<i64: 2, 1, 128>}, {transform_indices = @transform_2, window_bounds = array<i64: 2, 1, 128>}]} {
    %c0 = arith.constant 0 : index
    %c0_0 = arith.constant 0 : index
    %c0_1 = arith.constant 0 : index
    %0 = vector.load %arg2[%c0, %c0_0, %c0_1] : memref<2x1x128xf32, #tpu.memory_space<vmem>>, vector<1x1x128xf32>
    %1 = vector.shape_cast %0 : vector<1x1x128xf32> to vector<1x128xf32>
    %c1 = arith.constant 1 : index
    %c0_2 = arith.constant 0 : index
    %c0_3 = arith.constant 0 : index
    %2 = vector.load %arg2[%c1, %c0_2, %c0_3] : memref<2x1x128xf32, #tpu.memory_space<vmem>>, vector<1x1x128xf32>
    %3 = vector.shape_cast %2 : vector<1x1x128xf32> to vector<1x128xf32>
    %c0_4 = arith.constant 0 : index
    %4 = memref.load %arg1[%c0_4] : memref<12xf32, #tpu.memory_space<smem>>
    %c1_5 = arith.constant 1 : index
    %5 = memref.load %arg1[%c1_5] : memref<12xf32, #tpu.memory_space<smem>>
    %c2 = arith.constant 2 : index
    %6 = memref.load %arg1[%c2] : memref<12xf32, #tpu.memory_space<smem>>
    %c3 = arith.constant 3 : index
    %7 = memref.load %arg1[%c3] : memref<12xf32, #tpu.memory_space<smem>>
    %c4 = arith.constant 4 : index
    %8 = memref.load %arg1[%c4] : memref<12xf32, #tpu.memory_space<smem>>
    %c5 = arith.constant 5 : index
    %9 = memref.load %arg1[%c5] : memref<12xf32, #tpu.memory_space<smem>>
    %c6 = arith.constant 6 : index
    %10 = memref.load %arg1[%c6] : memref<12xf32, #tpu.memory_space<smem>>
    %c7 = arith.constant 7 : index
    %11 = memref.load %arg1[%c7] : memref<12xf32, #tpu.memory_space<smem>>
    %c8 = arith.constant 8 : index
    %12 = memref.load %arg1[%c8] : memref<12xf32, #tpu.memory_space<smem>>
    %c9 = arith.constant 9 : index
    %13 = memref.load %arg1[%c9] : memref<12xf32, #tpu.memory_space<smem>>
    %c10 = arith.constant 10 : index
    %14 = memref.load %arg1[%c10] : memref<12xf32, #tpu.memory_space<smem>>
    %c11 = arith.constant 11 : index
    %15 = memref.load %arg1[%c11] : memref<12xf32, #tpu.memory_space<smem>>
    %16 = vector.broadcast %4 : f32 to vector<1x128xf32>
    %17 = arith.mulf %1, %16 : vector<1x128xf32>
    %18 = vector.broadcast %6 : f32 to vector<1x128xf32>
    %19 = arith.mulf %3, %18 : vector<1x128xf32>
    %20 = arith.addf %17, %19 : vector<1x128xf32>
    %21 = vector.broadcast %8 : f32 to vector<1x128xf32>
    %22 = arith.addf %20, %21 : vector<1x128xf32>
    %cst = arith.constant 0.000000e+00 : f32
    %23 = vector.broadcast %cst : f32 to vector<1x128xf32>
    %24 = arith.maximumf %22, %23 : vector<1x128xf32>
    %25 = vector.broadcast %5 : f32 to vector<1x128xf32>
    %26 = arith.mulf %1, %25 : vector<1x128xf32>
    %27 = vector.broadcast %7 : f32 to vector<1x128xf32>
    %28 = arith.mulf %3, %27 : vector<1x128xf32>
    %29 = arith.addf %26, %28 : vector<1x128xf32>
    %30 = vector.broadcast %9 : f32 to vector<1x128xf32>
    %31 = arith.addf %29, %30 : vector<1x128xf32>
    %cst_6 = arith.constant 0.000000e+00 : f32
    %32 = vector.broadcast %cst_6 : f32 to vector<1x128xf32>
    %33 = arith.maximumf %31, %32 : vector<1x128xf32>
    %34 = vector.broadcast %10 : f32 to vector<1x128xf32>
    %35 = arith.mulf %24, %34 : vector<1x128xf32>
    %36 = vector.broadcast %11 : f32 to vector<1x128xf32>
    %37 = arith.mulf %33, %36 : vector<1x128xf32>
    %38 = arith.addf %35, %37 : vector<1x128xf32>
    %39 = vector.broadcast %12 : f32 to vector<1x128xf32>
    %40 = arith.addf %38, %39 : vector<1x128xf32>
    %c0_7 = arith.constant 0 : index
    %c0_8 = arith.constant 0 : index
    %c0_9 = arith.constant 0 : index
    %41 = vector.load %arg3[%c0_7, %c0_8, %c0_9] : memref<2x1x128xf32, #tpu.memory_space<vmem>>, vector<1x1x128xf32>
    %42 = vector.shape_cast %41 : vector<1x1x128xf32> to vector<1x128xf32>
    %43 = vector.shape_cast %40 : vector<1x128xf32> to vector<1x1x128xf32>
    tpu.vector_store %arg3[%c0_7, %c0_8, %c0_9], %43 {strides = array<i32>} : memref<2x1x128xf32, #tpu.memory_space<vmem>>, vector<1x1x128xf32>,
    %44 = vector.broadcast %13 : f32 to vector<1x128xf32>
    %45 = arith.mulf %24, %44 : vector<1x128xf32>
    %46 = vector.broadcast %14 : f32 to vector<1x128xf32>
    %47 = arith.mulf %33, %46 : vector<1x128xf32>
    %48 = arith.addf %45, %47 : vector<1x128xf32>
    %49 = vector.broadcast %15 : f32 to vector<1x128xf32>
    %50 = arith.addf %48, %49 : vector<1x128xf32>
    %c1_10 = arith.constant 1 : index
    %c0_11 = arith.constant 0 : index
    %c0_12 = arith.constant 0 : index
    %51 = vector.load %arg3[%c1_10, %c0_11, %c0_12] : memref<2x1x128xf32, #tpu.memory_space<vmem>>, vector<1x1x128xf32>
    %52 = vector.shape_cast %51 : vector<1x1x128xf32> to vector<1x128xf32>
    %53 = vector.shape_cast %50 : vector<1x128xf32> to vector<1x1x128xf32>
    tpu.vector_store %arg3[%c1_10, %c0_11, %c0_12], %53 {strides = array<i32>} : memref<2x1x128xf32, #tpu.memory_space<vmem>>, vector<1x1x128xf32>,
    return
  }
  func.func @transform_0(%arg0: i32) -> i32 {
    %c0_i32 = arith.constant 0 : i32
    %c0_i32_0 = arith.constant 0 : i32
    return %c0_i32 : i32
  }
  func.func @transform_1(%arg0: i32) -> (i32, i32, i32) {
    %c0_i32 = arith.constant 0 : i32
    %c0_i32_0 = arith.constant 0 : i32
    %c0_i32_1 = arith.constant 0 : i32
    return %c0_i32, %arg0, %c0_i32_0 : i32, i32, i32
  }
  func.func @transform_2(%arg0: i32) -> (i32, i32, i32) {
    %c0_i32 = arith.constant 0 : i32
    %c0_i32_0 = arith.constant 0 : i32
    %c0_i32_1 = arith.constant 0 : i32
    return %c0_i32, %arg0, %c0_i32_0 : i32, i32, i32
  }
}

</mosaic_0001>

<llo_original>
// kernel: multi_head_logistic_regression.1
$region0: #{multi_head_logistic_regression.1}
  #allocation0 [shape = 'u32[]', space=smem, size = 0x4, offset = 0x4, fixed_abs, tag = 'smem constant byte address 0x4 - core index']
  #allocation1 [shape = 'u32[144,128]{1,0:T(1,128)}', space=vmem, size = 0x12000, scoped, tag = 'internal scratch']
  %s0 = inlined_call_operand.vmem [shape: f32[12], index: 0, kind: input, shape index: {}]
  %s1 = inlined_call_operand.vmem [shape: f32[2,1,128], index: 1, kind: input, shape index: {}]
  %s2 = inlined_call_operand.vmem [shape: f32[2,1,128], index: 2, kind: output, shape index: {}]
  %s3 = sld [smem:[#allocation0]]
  $region22: #{multi_head_logistic_regression.1} parent=0
    _
  %s5 = ssub.s32 1, %s3
  %s6 = scalar_select 0, %s5, %s3
  $region1: #{multi_head_logistic_regression.1} parent=0
    #allocation2 [shape = 'u8[512]{0}', space=smem, size = 0x200, scoped, tag = 'input window, operand 0, single buffered']
    #allocation3 [shape = 's32[1]{0}', space=sflag, size = 0x4, scoped, tag = 'scoped memory for multi_head_logistic_regression.1']
    %7 = vsyncpa [#allocation3], 0
    // Predicated region
    $region2: #{multi_head_logistic_regression.1} parent=1 // pred_check
      _
    $region3: #{multi_head_logistic_regression.1} parent=1 // pred_check_branch
      %9 = sbr.rel (0) target = $region5
    $region4: #{multi_head_logistic_regression.1} parent=1 // pred_region
      %s11 = ssub.s32 16, 16
      %12 = vsyncadd [#allocation3], %s11
      %s14 = sshll.u32 %s0, 4
      %s15 = int_to_ptr.vmem [resolvable:$true] %s14
      %17 = dma.vmem_to_smem %s15, 16, [#allocation2], [#allocation3]
    $region5: #{multi_head_logistic_regression.1} parent=1 // pred_fallthru
      _
    // Predicated region
    $region6: #{multi_head_logistic_regression.1} parent=1 // pred_check
      _
    $region7: #{multi_head_logistic_regression.1} parent=1 // pred_check_branch
      %19 = sbr.rel (0) target = $region9
    $region8: #{multi_head_logistic_regression.1} parent=1 // pred_region
      _
    $region9: #{multi_head_logistic_regression.1} parent=1 // pred_fallthru
      _
    // Predicated region
    $region10: #{multi_head_logistic_regression.1} parent=1 // pred_check
      _
    $region11: #{multi_head_logistic_regression.1} parent=1 // pred_check_branch
      %21 = sbr.rel (0) target = $region13
    $region12: #{multi_head_logistic_regression.1} parent=1 // pred_region
      %22 = dma.done [#allocation3], 16
    $region13: #{multi_head_logistic_regression.1} parent=1 // pred_fallthru
      _
    %23 = sfence
    %v24 = vld [vmem:[%s1] sm:$0x1]
    %s25 = scalar_lea.vmem %s1, 1
    %v26 = vld [vmem:[%s25] sm:$0x1]
    %s27 = sld [smem:[#allocation2]]
    %s28 = sld [smem:[#allocation2 + $0x1]]
    %s29 = sld [smem:[#allocation2 + $0x2]]
    %s30 = sld [smem:[#allocation2 + $0x3]]
    %s31 = sld [smem:[#allocation2 + $0x4]]
    %s32 = sld [smem:[#allocation2 + $0x5]]
    %s33 = sld [smem:[#allocation2 + $0x6]]
    %s34 = sld [smem:[#allocation2 + $0x7]]
    %s35 = sld [smem:[#allocation2 + $0x8]]
    %s36 = sld [smem:[#allocation2 + $0x9]]
    %s37 = sld [smem:[#allocation2 + $0xa]]
    %s38 = sld [smem:[#allocation2 + $0xb]]
    %v39 = vstv %s27
    %v40 = vmul.f32 %v24, %v39
    %v41 = vstv %s29
    %v42 = vmul.f32 %v26, %v41
    %v43 = vadd.f32 %v40, %v42
    %v44 = vstv %s31
    %v45 = vadd.f32 %v43, %v44
    %v46 = vmax.f32 %v45, 0.0
    %v47 = vstv %s28
    %v48 = vmul.f32 %v24, %v47
    %v49 = vstv %s30
    %v50 = vmul.f32 %v26, %v49
    %v51 = vadd.f32 %v48, %v50
    %v52 = vstv %s32
    %v53 = vadd.f32 %v51, %v52
    %v54 = vmax.f32 %v53, 0.0
    %v55 = vstv %s33
    %v56 = vmul.f32 %v46, %v55
    %v57 = vstv %s34
    %v58 = vmul.f32 %v54, %v57
    %v59 = vadd.f32 %v56, %v58
    %v60 = vstv %s35
    %v61 = vadd.f32 %v59, %v60
    %62 = vst [vmem:[%s2] sm:$0x1] %v61
    %v63 = vstv %s36
    %v64 = vmul.f32 %v46, %v63
    %v65 = vstv %s37
    %v66 = vmul.f32 %v54, %v65
    %v67 = vadd.f32 %v64, %v66
    %v68 = vstv %s38
    %v69 = vadd.f32 %v67, %v68
    %s70 = scalar_lea.vmem %s2, 1
    %71 = vst [vmem:[%s70] sm:$0x1] %v69
    // Predicated region
    $region14: #{multi_head_logistic_regression.1} parent=1 // pred_check
      _
    $region15: #{multi_head_logistic_regression.1} parent=1 // pred_check_branch
      %73 = sbr.rel (0) target = $region17
    $region16: #{multi_head_logistic_regression.1} parent=1 // pred_region
      _
    $region17: #{multi_head_logistic_regression.1} parent=1 // pred_fallthru
      _
    // Predicated region
    $region18: #{multi_head_logistic_regression.1} parent=1 // pred_check
      _
    $region19: #{multi_head_logistic_regression.1} parent=1 // pred_check_branch
      %75 = sbr.rel (0) target = $region21
    $region20: #{multi_head_logistic_regression.1} parent=1 // pred_region
      _
    $region21: #{multi_head_logistic_regression.1} parent=1 // pred_fallthru
      _
    %76 = vsyncpa [#allocation3], 1

</llo_original>
